<compile_context>
chip_gen: v7x
topology: tpu7x:2x2x1
jax: 0.10.0
libtpu: 0.0.40
codegen_flags: <defaults>
</compile_context>

<pallas_src>
import functools
import math

import jax
import jax.numpy as jnp
from jax import lax
from jax.experimental import pallas as pl
from jax.experimental.pallas import tpu as pltpu


# ----------------------------- tile helpers ---------------------------------

def _pick_tile(dim, target, granule):
    """Largest multiple of `granule` <= target that divides `dim`; else full dim.

    Full dim is always a legal Pallas block size, so the fallback is safe even
    when `dim` is not a multiple of (8, 128).
    """
    if dim <= target:
        return dim
    t = (target // granule) * granule
    while t >= granule:
        if dim % t == 0:
            return t
        t -= granule
    return dim


# ----------------------------- Pallas kernels -------------------------------

def _linear_kernel(x_ref, w_ref, b_ref, o_ref, acc_ref, *, compute_dtype):
    # Tiled  o[i, j] = sum_k x[i, k] @ w[k, j]  + b[j]
    @pl.when(pl.program_id(2) == 0)
    def _init():
        acc_ref[...] = jnp.zeros_like(acc_ref)

    acc_ref[...] += jnp.dot(
        x_ref[...].astype(compute_dtype),
        w_ref[...].astype(compute_dtype),
        preferred_element_type=jnp.float32,
    )

    @pl.when(pl.program_id(2) == pl.num_programs(2) - 1)
    def _finalize():
        o_ref[...] = (acc_ref[...] + b_ref[...]).astype(o_ref.dtype)


def _flash_attn_kernel(q_ref, k_ref, v_ref, o_ref, m_ref, l_ref, acc_ref, *,
                       scale, n_head, head_dim, q_blk, kv_blk, compute_dtype):
    """One (batch, q-tile) pair; KV axis is the innermost ("arbitrary") grid dim.

    q_ref: (1, q_blk, C), k_ref/v_ref: (1, kv_blk, C), o_ref: (1, q_blk, C).
    Heads live in the packed lane dimension C = n_head * head_dim and are
    sliced statically inside the kernel (no HBM head transposes).
    """
    qi = pl.program_id(1)
    ki = pl.program_id(2)

    @pl.when(ki == 0)
    def _init():
        m_ref[...] = jnp.full_like(m_ref, -1e30)
        l_ref[...] = jnp.zeros_like(l_ref)
        acc_ref[...] = jnp.zeros_like(acc_ref)

    q_start = qi * q_blk
    kv_start = ki * kv_blk

    # Skip KV blocks that lie entirely above the causal diagonal for this q tile.
    @pl.when(kv_start <= q_start + (q_blk - 1))
    def _compute():
        q = q_ref[0]          # (q_blk, C)
        k = k_ref[0]          # (kv_blk, C)
        v = v_ref[0]          # (kv_blk, C)

        # Per-tile causal mask: one iota pair, shared by all heads; finite fill.
        row = q_start + lax.broadcasted_iota(jnp.int32, (q_blk, kv_blk), 0)
        col = kv_start + lax.broadcasted_iota(jnp.int32, (q_blk, kv_blk), 1)
        causal = col <= row

        for h in range(n_head):                      # static unroll over heads
            sl = slice(h * head_dim, (h + 1) * head_dim)
            qh = q[:, sl].astype(compute_dtype)
            kh = k[:, sl].astype(compute_dtype)
            vh = v[:, sl].astype(compute_dtype)

            # scores: contract last dims of both operands (no explicit k.T)
            s = lax.dot_general(qh, kh, (((1,), (1,)), ((), ())),
                                preferred_element_type=jnp.float32) * scale
            s = jnp.where(causal, s, -1e30)

            m_prev = m_ref[h]                                    # (q_blk, 1)
            m_new = jnp.maximum(m_prev, jnp.max(s, axis=-1, keepdims=True))
            alpha = jnp.exp(m_prev - m_new)
            p = jnp.exp(s - m_new)                               # (q_blk, kv_blk)
            l_ref[h] = alpha * l_ref[h] + jnp.sum(p, axis=-1, keepdims=True)
            acc_ref[h] = alpha * acc_ref[h] + lax.dot_general(
                p.astype(compute_dtype), vh, (((1,), (0,)), ((), ())),
                preferred_element_type=jnp.float32)
            m_ref[h] = m_new

    @pl.when(ki == pl.num_programs(2) - 1)
    def _finalize():
        # Lane-dense store: all heads concatenated -> last dim C (>=128 for GPT).
        outs = [acc_ref[h] * pl.reciprocal(l_ref[h], approx=True)
                for h in range(n_head)]
        o_ref[0] = jnp.concatenate(outs, axis=-1).astype(o_ref.dtype)


# ------------------------------- wrappers ------------------------------------

def pallas_linear(x, w, b, *, compute_dtype=jnp.float32,
                  tm_target=256, tn_target=256, tk_target=512):
    """x: (M, K) @ w: (K, N) + b: (N,) -> (M, N) float32, tiled & pipelined."""
    M, K = x.shape
    K2, N = w.shape
    assert K == K2
    tm = _pick_tile(M, tm_target, 8)      # sublane granule
    tn = _pick_tile(N, tn_target, 128)    # lane granule
    tk = _pick_tile(K, tk_target, 128)    # lane (x) / sublane (w) granule
    grid = (M // tm, N // tn, K // tk)

    kernel = functools.partial(_linear_kernel, compute_dtype=compute_dtype)
    return pl.pallas_call(
        kernel,
        out_shape=jax.ShapeDtypeStruct((M, N), jnp.float32),
        grid_spec=pltpu.PrefetchScalarGridSpec(
            num_scalar_prefetch=0,
            grid=grid,
            in_specs=[
                pl.BlockSpec((tm, tk), lambda i, j, k: (i, k)),
                pl.BlockSpec((tk, tn), lambda i, j, k: (k, j)),
                pl.BlockSpec((1, tn), lambda i, j, k: (0, j)),
            ],
            out_specs=pl.BlockSpec((tm, tn), lambda i, j, k: (i, j)),
            scratch_shapes=[pltpu.VMEM((tm, tn), jnp.float32)],
        ),
        compiler_params=pltpu.CompilerParams(
            dimension_semantics=("parallel", "parallel", "arbitrary")),
    )(x, w, b.reshape(1, N))


def pallas_flash_attention(qkv, n_head, *, compute_dtype=jnp.float32,
                           q_blk_target=256, kv_blk_target=256):
    """qkv: (B, T, 3*C) packed projections -> (B, T, C) causal attention output."""
    B, T, C3 = qkv.shape
    C = C3 // 3
    head_dim = C // n_head
    scale = 1.0 / math.sqrt(head_dim)

    q_blk = _pick_tile(T, q_blk_target, 8)
    kv_blk = _pick_tile(T, kv_blk_target, 8)
    grid = (B, T // q_blk, T // kv_blk)

    if C % 128 == 0:
        # Address q / k / v as blocks 0 / 1 / 2 along the packed 3*C lane axis:
        # no split copies, no head transposes through HBM.
        operands = (qkv, qkv, qkv)
        q_spec = pl.BlockSpec((1, q_blk, C), lambda b, qi, ki: (b, qi, 0))
        k_spec = pl.BlockSpec((1, kv_blk, C), lambda b, qi, ki: (b, ki, 1))
        v_spec = pl.BlockSpec((1, kv_blk, C), lambda b, qi, ki: (b, ki, 2))
    else:
        # Lane-block addressing needs C % 128 == 0; otherwise split once (still
        # no (B, H, T, hd) transposes).
        q = qkv[:, :, :C]
        k = qkv[:, :, C:2 * C]
        v = qkv[:, :, 2 * C:]
        operands = (q, k, v)
        q_spec = pl.BlockSpec((1, q_blk, C), lambda b, qi, ki: (b, qi, 0))
        k_spec = pl.BlockSpec((1, kv_blk, C), lambda b, qi, ki: (b, ki, 0))
        v_spec = pl.BlockSpec((1, kv_blk, C), lambda b, qi, ki: (b, ki, 0))

    kernel = functools.partial(
        _flash_attn_kernel, scale=scale, n_head=n_head, head_dim=head_dim,
        q_blk=q_blk, kv_blk=kv_blk, compute_dtype=compute_dtype)

    return pl.pallas_call(
        kernel,
        out_shape=jax.ShapeDtypeStruct((B, T, C), jnp.float32),
        grid_spec=pltpu.PrefetchScalarGridSpec(
            num_scalar_prefetch=0,
            grid=grid,
            in_specs=[q_spec, k_spec, v_spec],
            out_specs=pl.BlockSpec((1, q_blk, C), lambda b, qi, ki: (b, qi, 0)),
            scratch_shapes=[
                pltpu.VMEM((n_head, q_blk, 1), jnp.float32),          # running max m
                pltpu.VMEM((n_head, q_blk, 1), jnp.float32),          # running sum l
                pltpu.VMEM((n_head, q_blk, head_dim), jnp.float32),   # output acc
            ],
        ),
        compiler_params=pltpu.CompilerParams(
            dimension_semantics=("parallel", "parallel", "arbitrary")),
    )(*operands)


def causal_self_attention(x, params, n_head, *, compute_dtype=jnp.float32,
                          q_blk_target=256, kv_blk_target=256):
    """CausalSelfAttention.forward (eval mode) with prune masks applied, i.e.
    the attention sub-block of L1UnstructuredPruneableGPT (param.data *= mask,
    then c_attn -> causal SDPA -> c_proj; dropout = identity)."""
    B, T, C = x.shape

    # L1UnstructuredPruneableGPT.forward: weights are multiplied by their
    # prune masks before use.
    w_attn = params["w_attn"] * params["mask_attn"]
    w_proj = params["w_proj"] * params["mask_proj"]

    qkv = pallas_linear(x.reshape(B * T, C), w_attn, params["b_attn"],
                        compute_dtype=compute_dtype)                 # (B*T, 3C)
    y = pallas_flash_attention(qkv.reshape(B, T, 3 * C), n_head,
                               compute_dtype=compute_dtype,
                               q_blk_target=q_blk_target,
                               kv_blk_target=kv_blk_target)          # (B, T, C)
    out = pallas_linear(y.reshape(B * T, C), w_proj, params["b_proj"],
                        compute_dtype=compute_dtype)                 # (B*T, C)
    return out.reshape(B, T, C)


# ------------------------------ reference ------------------------------------

def reference_attention(x, params, n_head):
    B, T, C = x.shape
    hd = C // n_head
    w_attn = params["w_attn"] * params["mask_attn"]
    w_proj = params["w_proj"] * params["mask_proj"]
    qkv = x.reshape(B * T, C) @ w_attn + params["b_attn"]
    qkv = qkv.reshape(B, T, 3 * C)
    q, k, v = jnp.split(qkv, 3, axis=2)

    def heads(t):
        return t.reshape(B, T, n_head, hd).transpose(0, 2, 1, 3)

    q, k, v = heads(q), heads(k), heads(v)
    s = jnp.einsum("bhqd,bhkd->bhqk", q, k) / math.sqrt(hd)
    mask = jnp.tril(jnp.ones((T, T), dtype=bool))
    s = jnp.where(mask[None, None], s, -jnp.inf)
    p = jax.nn.softmax(s, axis=-1)
    y = jnp.einsum("bhqk,bhkd->bhqd", p, v)
    y = y.transpose(0, 2, 1, 3).reshape(B * T, C)
    return (y @ w_proj + params["b_proj"]).reshape(B, T, C)


# --------------------------------- main ---------------------------------------

if __name__ == "__main__":
    # Small config consistent with the module: n_embd % n_head == 0.
    # n_embd is a multiple of 128 so the packed-lane (q/k/v) BlockSpec path and
    # lane-dense output stores are exercised exactly as they would be for GPT-2.
    B, T = 2, 16
    n_embd, n_head = 128, 4

    key = jax.random.PRNGKey(0)
    k_x, k_wa, k_ba, k_wp, k_bp = jax.random.split(key, 5)

    x = jax.random.normal(k_x, (B, T, n_embd), dtype=jnp.float32)

    params = {
        "w_attn": 0.02 * jax.random.normal(k_wa, (n_embd, 3 * n_embd), jnp.float32),
        "b_attn": 0.01 * jax.random.normal(k_ba, (3 * n_embd,), jnp.float32),
        "w_proj": 0.02 * jax.random.normal(k_wp, (n_embd, n_embd), jnp.float32),
        "b_proj": 0.01 * jax.random.normal(k_bp, (n_embd,), jnp.float32),
        # L1-unstructured prune masks (all ones == nothing pruned yet), applied
        # in forward as in L1UnstructuredPruneableGPT: param.data *= mask.
        "mask_attn": jnp.ones((n_embd, 3 * n_embd), jnp.float32),
        "mask_proj": jnp.ones((n_embd, n_embd), jnp.float32),
    }

    ref = reference_attention(x, params, n_head)

    # f32 path; small q/kv tiles so the flash KV loop, the causal block skip and
    # the online-softmax accumulators are actually exercised (grid = (2, 2, 2)).
    out = causal_self_attention(x, params, n_head,
                                q_blk_target=8, kv_blk_target=8)
    out = jax.block_until_ready(out)
    assert out.shape == (B, T, n_embd)
    assert jnp.allclose(out, ref, atol=5e-4, rtol=2e-2), "f32 mismatch vs reference"

    # bf16 MXU-operand path (v6e/v7x-friendly): bf16 inputs, f32 accumulation,
    # f32 softmax statistics. Compared against the f32 reference with a loose
    # tolerance appropriate for bf16 operands.
    out_bf16 = causal_self_attention(x, params, n_head,
                                     compute_dtype=jnp.bfloat16,
                                     q_blk_target=8, kv_blk_target=8)
    out_bf16 = jax.block_until_ready(out_bf16)
    assert jnp.allclose(out_bf16, ref, atol=1e-2, rtol=1e-1), "bf16 mismatch vs reference"

    # TODO(synk): the rest of L1UnstructuredPruneableGPT.forward (embeddings,
    # LayerNorm, MLP/GELU, residuals, lm_head, cross-entropy) and the prune()
    # top-k mask update are not implemented here; dropout is identity (eval / p=0).
    print("KERNEL_OK")
</pallas_src>

<mosaic_0001>
module attributes {stable_mosaic.version = 11 : i64} {
  func.func @_linear_kernel(%arg0: i32, %arg1: i32, %arg2: i32, %arg3: memref<32x128xf32, #tpu.memory_space<vmem>>, %arg4: memref<128x128xf32, #tpu.memory_space<vmem>>, %arg5: memref<1x128xf32, #tpu.memory_space<vmem>>, %arg6: memref<32x128xf32, #tpu.memory_space<vmem>>, %arg7: memref<32x128xf32, #tpu.memory_space<vmem>>) attributes {dimension_semantics = [#tpu.dimension_semantics<parallel>, #tpu.dimension_semantics<parallel>, #tpu.dimension_semantics<arbitrary>], iteration_bounds = array<i64: 1, 3, 1>, scalar_prefetch = 0 : i64, scratch_operands = 1 : i64, tpu.core_type = #tpu.core_type<tc>, window_params = [{transform_indices = @transform_0, window_bounds = array<i64: 32, 128>}, {transform_indices = @transform_1, window_bounds = array<i64: 128, 128>}, {transform_indices = @transform_2, window_bounds = array<i64: 1, 128>}, {transform_indices = @transform_3, window_bounds = array<i64: 32, 128>}]} {
    %c0_i32 = arith.constant 0 : i32
    %0 = arith.cmpi eq, %arg2, %c0_i32 : i32
    %1 = arith.extui %0 : i1 to i32
    %c0_i32_0 = arith.constant 0 : i32
    %2 = arith.cmpi ne, %1, %c0_i32_0 : i32
    scf.if %2 {
      %cst_10 = arith.constant 0.000000e+00 : f32
      %12 = vector.broadcast %cst_10 : f32 to vector<32x128xf32>
      %c0_11 = arith.constant 0 : index
      %c0_12 = arith.constant 0 : index
      %13 = vector.load %arg7[%c0_11, %c0_12] : memref<32x128xf32, #tpu.memory_space<vmem>>, vector<32x128xf32>
      tpu.vector_store %arg7[%c0_11, %c0_12], %12 {strides = array<i32>} : memref<32x128xf32, #tpu.memory_space<vmem>>, vector<32x128xf32>,
    } else {
    }
    %c0 = arith.constant 0 : index
    %c0_1 = arith.constant 0 : index
    %3 = vector.load %arg7[%c0, %c0_1] : memref<32x128xf32, #tpu.memory_space<vmem>>, vector<32x128xf32>
    %c0_2 = arith.constant 0 : index
    %c0_3 = arith.constant 0 : index
    %4 = vector.load %arg3[%c0_2, %c0_3] : memref<32x128xf32, #tpu.memory_space<vmem>>, vector<32x128xf32>
    %c0_4 = arith.constant 0 : index
    %c0_5 = arith.constant 0 : index
    %5 = vector.load %arg4[%c0_4, %c0_5] : memref<128x128xf32, #tpu.memory_space<vmem>>, vector<128x128xf32>
    %cst = arith.constant dense<0.000000e+00> : vector<32x128xf32>
    %6 = tpu.matmul %4, %5, %cst {dimension_numbers = #tpu.dot_dimension_numbers<[1], [0], [0], [1], [0, 0, 1, 1], [], []>} : vector<32x128xf32>, vector<128x128xf32>, vector<32x128xf32> -> vector<32x128xf32>
    %7 = arith.addf %3, %6 : vector<32x128xf32>
    %c0_6 = arith.constant 0 : index
    %c0_7 = arith.constant 0 : index
    %8 = vector.load %arg7[%c0_6, %c0_7] : memref<32x128xf32, #tpu.memory_space<vmem>>, vector<32x128xf32>
    tpu.vector_store %arg7[%c0_6, %c0_7], %7 {strides = array<i32>} : memref<32x128xf32, #tpu.memory_space<vmem>>, vector<32x128xf32>,
    %c0_i32_8 = arith.constant 0 : i32
    %9 = arith.cmpi eq, %arg2, %c0_i32_8 : i32
    %10 = arith.extui %9 : i1 to i32
    %c0_i32_9 = arith.constant 0 : i32
    %11 = arith.cmpi ne, %10, %c0_i32_9 : i32
    scf.if %11 {
      %c0_10 = arith.constant 0 : index
      %c0_11 = arith.constant 0 : index
      %12 = vector.load %arg7[%c0_10, %c0_11] : memref<32x128xf32, #tpu.memory_space<vmem>>, vector<32x128xf32>
      %c0_12 = arith.constant 0 : index
      %c0_13 = arith.constant 0 : index
      %13 = vector.load %arg5[%c0_12, %c0_13] : memref<1x128xf32, #tpu.memory_space<vmem>>, vector<1x128xf32>
      %14 = vector.broadcast %13 : vector<1x128xf32> to vector<32x128xf32>
      %15 = arith.addf %12, %14 : vector<32x128xf32>
      %c0_14 = arith.constant 0 : index
      %c0_15 = arith.constant 0 : index
      %16 = vector.load %arg6[%c0_14, %c0_15] : memref<32x128xf32, #tpu.memory_space<vmem>>, vector<32x128xf32>
      tpu.vector_store %arg6[%c0_14, %c0_15], %15 {strides = array<i32>} : memref<32x128xf32, #tpu.memory_space<vmem>>, vector<32x128xf32>,
    } else {
    }
    return
  }
  func.func @transform_0(%arg0: i32, %arg1: i32, %arg2: i32) -> (i32, i32) {
    %c0_i32 = arith.constant 0 : i32
    return %arg0, %arg2 : i32, i32
  }
  func.func @transform_1(%arg0: i32, %arg1: i32, %arg2: i32) -> (i32, i32) {
    %c0_i32 = arith.constant 0 : i32
    return %arg2, %arg1 : i32, i32
  }
  func.func @transform_2(%arg0: i32, %arg1: i32, %arg2: i32) -> (i32, i32) {
    %c0_i32 = arith.constant 0 : i32
    %c0_i32_0 = arith.constant 0 : i32
    return %c0_i32, %arg1 : i32, i32
  }
  func.func @transform_3(%arg0: i32, %arg1: i32, %arg2: i32) -> (i32, i32) {
    %c0_i32 = arith.constant 0 : i32
    return %arg0, %arg1 : i32, i32
  }
}

</mosaic_0001>

<llo_original>
// kernel: tpu_custom_call.1
$region0: #{tpu_custom_call.1}
  #allocation0 [shape = 'u32[]', space=smem, size = 0x4, offset = 0x4, fixed_abs, tag = 'smem constant byte address 0x4 - core index']
  #allocation1 [shape = 'u32[144,128]{1,0:T(1,128)}', space=vmem, size = 0x12000, scoped, tag = 'internal scratch']
  #allocation2 [shape = 'f32[32,128]{1,0:T(8,128)}', space=vmem, size = 0x4000, scoped, tag = 'scratch operand']
  %s0 = inlined_call_operand.hbm [shape: f32[32,128], index: 0, kind: input, shape index: {}]
  %s1 = inlined_call_operand.hbm [shape: f32[128,384], index: 1, kind: input, shape index: {}]
  %s2 = inlined_call_operand.vmem [shape: f32[1,384], index: 2, kind: input, shape index: {}]
  %s3 = inlined_call_operand.hbm [shape: f32[32,384], index: 3, kind: output, shape index: {}]
  %s4 = sld [smem:[#allocation0]]
  $region61: #{tpu_custom_call.1} parent=0
    _
  %s6 = ssub.s32 1, %s4
  %s7 = scalar_select 0, %s6, %s4
  $region1: #{tpu_custom_call.1} parent=0
    #allocation3 [shape = 'u8[16384]{0}', space=vmem, size = 0x4000, scoped, tag = 'input window, operand 0, single buffered']
    #allocation4 [shape = 's32[2]{0}', space=sflag, size = 0x8, scoped, tag = 'scoped memory for tpu_custom_call.1']
    #allocation5 [shape = 's32[2]{0}', space=sflag, size = 0x8, scoped, tag = 'scoped memory for tpu_custom_call.1']
    #allocation6 [shape = 'u8[131072]{0}', space=vmem, size = 0x20000, scoped, tag = 'input window, operand 1']
    #allocation7 [shape = 's32[2]{0}', space=sflag, size = 0x8, scoped, tag = 'scoped memory for tpu_custom_call.1']
    #allocation8 [shape = 'u8[32768]{0}', space=vmem, size = 0x8000, scoped, tag = 'output window, operand 0']
    %8 = vsyncpa [#allocation4], 0
    %9 = vsyncpa [#allocation7], 0
    %s10 = scalar_lea.sflag [#allocation7], 1
    %11 = vsyncpa %s10, 0
    %12 = vsyncpa [#allocation5], 0
    %s13 = scalar_lea.sflag [#allocation5], 1
    %14 = vsyncpa %s13, 0
    loop: start=0, step=1, limit=5
    $region2: #{tpu_custom_call.1} parent=1 // loop_pre_header
      _
    $region3: #{tpu_custom_call.1} parent=1 // loop_header
      %s16 = sphi 0, %s20
      %p17 = scmp.ge.s32.totalorder %s16, 5
      %s23 = sphi 0, %s42
      %s24 = sphi 0, %s38
      %s25 = sphi 0, %s34
      %s26 = sphi 0, %s23
      %s27 = sphi 0, %s24
      %s28 = sphi 0, %s25
      %s29 = sphi 0, %s26
      %s30 = sphi 0, %s27
      %s31 = sphi 0, %s28
      %s47 = sphi 0, %s49
      %s50 = sphi 0, %s47
      %s51 = sphi 0, %s50
      %s67 = sphi 0, %s51
      %s75 = sphi 0, %s77
      %s78 = sphi 0, %s75
      %s79 = sphi 0, %s78
      %s95 = sphi 0, %s79
      %s101 = sphi 0, %s103
      %s104 = sphi 0, %s101
      %s105 = sphi 0, %s104
      %s121 = sphi 0, %s105
      %s129 = sphi 0, %s131
      %s132 = sphi 0, %s129
      %s133 = sphi 0, %s132
      %s149 = sphi 0, %s133
    $region4: #{tpu_custom_call.1} parent=1 // loop_header_branch
      %19 = sbr.rel (%p17) target = $region8
    $region5: #{tpu_custom_call.1} parent=1 // loop_body
      %s21 = ssub.s32 %s16, 1
      %s22 = ssub.s32 %s16, 2
      %s32 = sadd.s32 1, %s25
      %p33 = scmp.ge.s32.totalorder %s32, 1
      %s34 = scalar_select %p33, 0, %s32
      %s35 = sadd.s32 1, %s24
      %s36 = scalar_select %p33, %s35, %s24
      %p37 = scmp.ge.s32.totalorder %s36, 3
      %s38 = scalar_select %p37, 0, %s36
      %s39 = sadd.s32 1, %s23
      %s40 = scalar_select %p37, %s39, %s23
      %p41 = scmp.ge.s32.totalorder %s40, 1
      %s42 = scalar_select %p41, 0, %s40
      %s43 = ssub.s32 %s23, %s42
      %s44 = ssub.s32 %s25, %s34
      %s45 = sor.u32 %s43, %s44
      %p46 = scmp.eq.s32.totalorder %s45, 0
      %s48 = sadd.s32 %s47, 1
      %s49 = scalar_select %p46, %s47, %s48
      %p52 = pneg %p46
      %p53 = scmp.eq.s32.totalorder %s16, 2
      %p54 = por %p52, %p53
      %p55 = scmp.ne.s32.totalorder %s47, %s50
      %p56 = scmp.eq.s32.totalorder %s16, 0
      %p57 = por %p55, %p56
      %p58 = scmp.ne.s32.totalorder %s47, %s50
      %p59 = scmp.eq.s32.totalorder %s21, 2
      %p60 = por %p58, %p59
      %p61 = scmp.ne.s32.totalorder %s50, %s51
      %p62 = scmp.eq.s32.totalorder %s21, 0
      %p63 = por %p61, %p62
      %p64 = scmp.ne.s32.totalorder %s50, %s51
      %p65 = scmp.eq.s32.totalorder %s22, 2
      %p66 = por %p64, %p65
      %p68 = scmp.ne.s32.totalorder %s51, %s67
      %p69 = scmp.eq.s32.totalorder %s22, 0
      %p70 = por %p68, %p69
      %s71 = ssub.s32 %s25, %s34
      %s72 = ssub.s32 %s24, %s38
      %s73 = sor.u32 %s71, %s72
      %p74 = scmp.eq.s32.totalorder %s73, 0
      %s76 = sadd.s32 %s75, 1
      %s77 = scalar_select %p74, %s75, %s76
      %p80 = pneg %p74
      %p81 = scmp.eq.s32.totalorder %s16, 2
      %p82 = por %p80, %p81
      %p83 = scmp.ne.s32.totalorder %s75, %s78
      %p84 = scmp.eq.s32.totalorder %s16, 0
      %p85 = por %p83, %p84
      %p86 = scmp.ne.s32.totalorder %s75, %s78
      %p87 = scmp.eq.s32.totalorder %s21, 2
      %p88 = por %p86, %p87
      %p89 = scmp.ne.s32.totalorder %s78, %s79
      %p90 = scmp.eq.s32.totalorder %s21, 0
      %p91 = por %p89, %p90
      %p92 = scmp.ne.s32.totalorder %s78, %s79
      %p93 = scmp.eq.s32.totalorder %s22, 2
      %p94 = por %p92, %p93
      %p96 = scmp.ne.s32.totalorder %s79, %s95
      %p97 = scmp.eq.s32.totalorder %s22, 0
      %p98 = por %p96, %p97
      %s99 = ssub.s32 %s24, %s38
      %p100 = scmp.eq.s32.totalorder %s99, 0
      %s102 = sadd.s32 %s101, 1
      %s103 = scalar_select %p100, %s101, %s102
      %p106 = pneg %p100
      %p107 = scmp.eq.s32.totalorder %s16, 2
      %p108 = por %p106, %p107
      %p109 = scmp.ne.s32.totalorder %s101, %s104
      %p110 = scmp.eq.s32.totalorder %s16, 0
      %p111 = por %p109, %p110
      %p112 = scmp.ne.s32.totalorder %s101, %s104
      %p113 = scmp.eq.s32.totalorder %s21, 2
      %p114 = por %p112, %p113
      %p115 = scmp.ne.s32.totalorder %s104, %s105
      %p116 = scmp.eq.s32.totalorder %s21, 0
      %p117 = por %p115, %p116
      %p118 = scmp.ne.s32.totalorder %s104, %s105
      %p119 = scmp.eq.s32.totalorder %s22, 2
      %p120 = por %p118, %p119
      %p122 = scmp.ne.s32.totalorder %s105, %s121
      %p123 = scmp.eq.s32.totalorder %s22, 0
      %p124 = por %p122, %p123
      %s125 = ssub.s32 %s23, %s42
      %s126 = ssub.s32 %s24, %s38
      %s127 = sor.u32 %s125, %s126
      %p128 = scmp.eq.s32.totalorder %s127, 0
      %s130 = sadd.s32 %s129, 1
      %s131 = scalar_select %p128, %s129, %s130
      %p134 = pneg %p128
      %p135 = scmp.eq.s32.totalorder %s16, 2
      %p136 = por %p134, %p135
      %p137 = scmp.ne.s32.totalorder %s129, %s132
      %p138 = scmp.eq.s32.totalorder %s16, 0
      %p139 = por %p137, %p138
      %p140 = scmp.ne.s32.totalorder %s129, %s132
      %p141 = scmp.eq.s32.totalorder %s21, 2
      %p142 = por %p140, %p141
      %p143 = scmp.ne.s32.totalorder %s132, %s133
      %p144 = scmp.eq.s32.totalorder %s21, 0
      %p145 = por %p143, %p144
      %p146 = scmp.ne.s32.totalorder %s132, %s133
      %p147 = scmp.eq.s32.totalorder %s22, 2
      %p148 = por %p146, %p147
      %p150 = scmp.ne.s32.totalorder %s133, %s149
      %p151 = scmp.eq.s32.totalorder %s22, 0
      %p152 = por %p150, %p151
      %p153 = scmp.le.s32.totalorder 1, %s16
      %p154 = scmp.lt.s32.totalorder %s16, 4
      %p155 = pnand %p153, %p154
      %p156 = pneg %p155
      // Predicated region
      $region9: #{tpu_custom_call.1} parent=5 // pred_check
        _
      $region10: #{tpu_custom_call.1} parent=5 // pred_check_branch
        %158 = sbr.rel (%p155) target = $region12
      $region11: #{tpu_custom_call.1} parent=5 // pred_region
        %s159 = ssub.s32 %s16, 1
        // Predicated region
        $region13: #{tpu_custom_call.1} parent=11 // pred_check
          %p160 = pneg %p63
        $region14: #{tpu_custom_call.1} parent=11 // pred_check_branch
          %162 = sbr.rel (%p160) target = $region16
        $region15: #{tpu_custom_call.1} parent=11 // pred_region
          %s163 = smul.u32 4, %s26
          %s165 = ssub.s32 512, 512
          %166 = vsyncadd [#allocation4], %s165
          %s167 = sadd.s32 %s28, %s163
          %s168 = smul.addr %s167, 128
          %s169 = scalar_lea.hbm %s0, %s168
          %s170 = sshll.u32 [#allocation3], 4
          %s171 = int_to_ptr.vmem [resolvable:$true] %s170
          %176 = dma.hbm_to_vmem [thread:$0]  %s169, 512, %s171, [#allocation4], 128, 128, 8
        $region16: #{tpu_custom_call.1} parent=11 // pred_fallthru
          _
      $region12: #{tpu_custom_call.1} parent=5 // pred_fallthru
        _
      %p177 = scmp.lt.s32.totalorder %s16, 3
      // Predicated region
      $region17: #{tpu_custom_call.1} parent=5 // pred_check
        %p178 = pneg %p177
      $region18: #{tpu_custom_call.1} parent=5 // pred_check_branch
        %180 = sbr.rel (%p178) target = $region20
      $region19: #{tpu_custom_call.1} parent=5 // pred_region
        // Predicated region
        $region21: #{tpu_custom_call.1} parent=19 // pred_check
          %p181 = pneg %p85
        $region22: #{tpu_custom_call.1} parent=19 // pred_check_branch
          %183 = sbr.rel (%p181) target = $region24
        $region23: #{tpu_custom_call.1} parent=19 // pred_region
          %s184 = sand.u32 %s75, 1
          %s185 = scalar_lea.sflag [#allocation7], %s184
          %s186 = sand.u32 %s75, 1
          %s187 = smul.addr %s186, 128
          %s188 = scalar_lea.vmem [#allocation6], %s187
          %s189 = smul.u32 16, %s25
          %s191 = ssub.s32 2048, 2048
          %192 = vsyncadd %s185, %s191
          %s193 = smul.addr %s189, 3
          %s194 = sadd.s32 %s24, %s193
          %s195 = smul.addr %s194, 128
          %s196 = scalar_lea.hbm %s1, %s195
          %s197 = sshll.u32 %s188, 4
          %s198 = int_to_ptr.vmem [resolvable:$true] %s197
          %203 = dma.hbm_to_vmem [thread:$0]  %s196, 2048, %s198, %s185, 384, 128, 8
        $region24: #{tpu_custom_call.1} parent=19 // pred_fallthru
          _
        // Predicated region
        $region25: #{tpu_custom_call.1} parent=19 // pred_check
          %p204 = pneg %p111
        $region26: #{tpu_custom_call.1} parent=19 // pred_check_branch
          %206 = sbr.rel (%p204) target = $region28
        $region27: #{tpu_custom_call.1} parent=19 // pred_region
          %p207 = scmp.lt.s32.totalorder %s24, 2
          %s208 = scalar_select %p207, %s24, 2
          %s209 = scalar_lea.vmem %s2, %s208
        $region28: #{tpu_custom_call.1} parent=19 // pred_fallthru
          _
      $region20: #{tpu_custom_call.1} parent=5 // pred_fallthru
        _
      %p210 = scmp.le.s32.totalorder 1, %s16
      %p211 = scmp.lt.s32.totalorder %s16, 4
      %p212 = pnand %p210, %p211
      %p213 = pneg %p212
      // Predicated region
      $region29: #{tpu_custom_call.1} parent=5 // pred_check
        _
      $region30: #{tpu_custom_call.1} parent=5 // pred_check_branch
        %215 = sbr.rel (%p212) target = $region32
      $region31: #{tpu_custom_call.1} parent=5 // pred_region
        %s216 = ssub.s32 %s16, 1
        // Predicated region
        $region33: #{tpu_custom_call.1} parent=31 // pred_check
          %p217 = pneg %p63
        $region34: #{tpu_custom_call.1} parent=31 // pred_check_branch
          %219 = sbr.rel (%p217) target = $region36
        $region35: #{tpu_custom_call.1} parent=31 // pred_region
          %220 = dma.done [#allocation4], 512
        $region36: #{tpu_custom_call.1} parent=31 // pred_fallthru
          _
        %s221 = sand.u32 %s78, 1
        %s222 = scalar_lea.sflag [#allocation7], %s221
        %s223 = sand.u32 %s78, 1
        %s224 = smul.addr %s223, 128
        %s225 = scalar_lea.vmem [#allocation6], %s224
        // Predicated region
        $region37: #{tpu_custom_call.1} parent=31 // pred_check
          %p226 = pneg %p91
        $region38: #{tpu_custom_call.1} parent=31 // pred_check_branch
          %228 = sbr.rel (%p226) target = $region40
        $region39: #{tpu_custom_call.1} parent=31 // pred_region
          %229 = dma.done %s222, 2048
        $region40: #{tpu_custom_call.1} parent=31 // pred_fallthru
          _
        %p230 = pneg %p63
        %p231 = pneg %p60
        %s232 = sand.u32 %s78, 1
        %s233 = scalar_lea.sflag [#allocation7], %s232
        %s234 = sand.u32 %s78, 1
        %s235 = smul.addr %s234, 128
        %s236 = scalar_lea.vmem [#allocation6], %s235
        %p237 = pneg %p91
        %p238 = pneg %p88
        %p239 = scmp.lt.s32.totalorder %s27, 2
        %s240 = scalar_select %p239, %s27, 2
        %s241 = scalar_lea.vmem %s2, %s240
        %p242 = pneg %p117
        %p243 = pneg %p114
        %p244 = pneg %p145
        %p245 = pneg %p142
        %s246 = sand.u32 %s132, 1
        %s247 = scalar_lea.sflag [#allocation5], %s246
        %s248 = sand.u32 %s132, 1
        %s249 = smul.addr %s248, 32
        %s250 = scalar_lea.vmem [#allocation8], %s249
        %s251 = smul.u32 4, %s26
        %s252 = smul.u32 16, %s28
        %p253 = scmp.lt.s32.totalorder %s27, 2
        %s254 = scalar_select %p253, %s27, 2
        %s255 = scalar_lea.vmem %s2, %s254
        %s256 = smul.u32 4, %s26
        %p257 = scmp.eq.s32.totalorder %s28, 0
        // Predicated region
        $region41: #{tpu_custom_call.1} parent=31 // pred_check
          %p258 = pneg %p257
        $region42: #{tpu_custom_call.1} parent=31 // pred_check_branch
          %260 = sbr.rel (%p258) target = $region44
        $region43: #{tpu_custom_call.1} parent=31 // pred_region
          %261 = vst [vmem:[#allocation2] sm:$0xff] 0.0
          %262 = vst [vmem:[#allocation2 + $0x8] sm:$0xff] 0.0
          %263 = vst [vmem:[#allocation2 + $0x10] sm:$0xff] 0.0
          %264 = vst [vmem:[#allocation2 + $0x18] sm:$0xff] 0.0
        $region44: #{tpu_custom_call.1} parent=31 // pred_fallthru
          _
        %v265 = vld [vmem:[#allocation2] sm:$0xff]
        %v266 = vld [vmem:[#allocation2 + $0x8] sm:$0xff]
        %v267 = vld [vmem:[#allocation2 + $0x10] sm:$0xff]
        %v268 = vld [vmem:[#allocation2 + $0x18] sm:$0xff]
        %v269 = vld [vmem:[#allocation3] sm:$0xff]
        %v270 = vld [vmem:[#allocation3 + $0x8] sm:$0xff]
        %v271 = vld [vmem:[#allocation3 + $0x10] sm:$0xff]
        %v272 = vld [vmem:[#allocation3 + $0x18] sm:$0xff]
        %v273 = vld [vmem:[%s225] sm:$0xff]
        %v274 = vld [vmem:[%s225 + $0x8] sm:$0xff]
        %v275 = vld [vmem:[%s225 + $0x10] sm:$0xff]
        %v276 = vld [vmem:[%s225 + $0x18] sm:$0xff]
        %v277 = vld [vmem:[%s225 + $0x20] sm:$0xff]
        %v278 = vld [vmem:[%s225 + $0x28] sm:$0xff]
        %v279 = vld [vmem:[%s225 + $0x30] sm:$0xff]
        %v280 = vld [vmem:[%s225 + $0x38] sm:$0xff]
        %v281 = vld [vmem:[%s225 + $0x40] sm:$0xff]
        %v282 = vld [vmem:[%s225 + $0x48] sm:$0xff]
        %v283 = vld [vmem:[%s225 + $0x50] sm:$0xff]
        %v284 = vld [vmem:[%s225 + $0x58] sm:$0xff]
        %v285 = vld [vmem:[%s225 + $0x60] sm:$0xff]
        %v286 = vld [vmem:[%s225 + $0x68] sm:$0xff]
        %v287 = vld [vmem:[%s225 + $0x70] sm:$0xff]
        %v288 = vld [vmem:[%s225 + $0x78] sm:$0xff]
        %289 = vmatprep.subr.mxu0 0.0
        %290 = vmatpush1.msra.mxu0 %v273
        %291 = vmatprep.subr.mxu0 0.0
        %292 = vmatpush1.msra.mxu0 %v274
        %293 = vmatprep.subr.mxu0 0.0
        %294 = vmatpush1.msra.mxu0 %v275
        %295 = vmatprep.subr.mxu0 0.0
        %296 = vmatpush1.msra.mxu0 %v276
        %297 = vmatprep.subr.mxu0 0.0
        %298 = vmatpush1.msra.mxu0 %v277
        %299 = vmatprep.subr.mxu0 0.0
        %300 = vmatpush1.msra.mxu0 %v278
        %301 = vmatprep.subr.mxu0 0.0
        %302 = vmatpush1.msra.mxu0 %v279
        %303 = vmatprep.subr.mxu0 0.0
        %304 = vmatpush1.msra.mxu0 %v280
        %305 = vmatprep.subr.mxu0 0.0
        %306 = vmatpush1.msra.mxu0 %v281
        %307 = vmatprep.subr.mxu0 0.0
        %308 = vmatpush1.msra.mxu0 %v282
        %309 = vmatprep.subr.mxu0 0.0
        %310 = vmatpush1.msra.mxu0 %v283
        %311 = vmatprep.subr.mxu0 0.0
        %312 = vmatpush1.msra.mxu0 %v284
        %313 = vmatprep.subr.mxu0 0.0
        %314 = vmatpush1.msra.mxu0 %v285
        %315 = vmatprep.subr.mxu0 0.0
        %316 = vmatpush1.msra.mxu0 %v286
        %317 = vmatprep.subr.mxu0 0.0
        %318 = vmatpush1.msra.mxu0 %v287
        %319 = vmatprep.subr.mxu0 0.0
        %320 = vmatpush1.msra.mxu0 %v288
        %321 = vmatprep.subr.mxu0 0.0
        %322 = vmatpush1.msra.mxu0 0.0
        %323 = vmatprep.subr.mxu0 0.0
        %324 = vmatpush1.msra.mxu0 0.0
        %325 = vmatprep.subr.mxu0 0.0
        %326 = vmatpush1.msra.mxu0 0.0
        %327 = vmatprep.subr.mxu0 0.0
        %328 = vmatpush1.msra.mxu0 0.0
        %329 = vmatprep.subr.mxu0 0.0
        %330 = vmatpush1.msra.mxu0 0.0
        %331 = vmatprep.subr.mxu0 0.0
        %332 = vmatpush1.msra.mxu0 0.0
        %333 = vmatprep.subr.mxu0 0.0
        %334 = vmatpush1.msra.mxu0 0.0
        %335 = vmatprep.subr.mxu0 0.0
        %336 = vmatpush1.msra.mxu0 0.0
        %337 = vmatprep.subr.mxu0 0.0
        %338 = vmatpush1.msra.mxu0 0.0
        %339 = vmatprep.subr.mxu0 0.0
        %340 = vmatpush1.msra.mxu0 0.0
        %341 = vmatprep.subr.mxu0 0.0
        %342 = vmatpush1.msra.mxu0 0.0
        %343 = vmatprep.subr.mxu0 0.0
        %344 = vmatpush1.msra.mxu0 0.0
        %345 = vmatprep.subr.mxu0 0.0
        %346 = vmatpush1.msra.mxu0 0.0
        %347 = vmatprep.subr.mxu0 0.0
        %348 = vmatpush1.msra.mxu0 0.0
        %349 = vmatprep.subr.mxu0 0.0
        %350 = vmatpush1.msra.mxu0 0.0
        %351 = vmatprep.subr.mxu0 0.0
        %352 = vmatpush1.msra.mxu0 0.0
        %353 = vmatprep.mubr.f32.mxu0 0.0
        %354 = vmatmul.mubr.f32.gmra.mrb[0].mxu0 %v269
        %v355 = vpop.f32.mrb[0].mxu0
        %v356 = vadd.f32 0.0, %v355
        %v357 = vpop.f32.mrb[0].mxu0
        %358 = vmatprep.mubr.f32.mxu0 0.0
        %359 = vmatmul.mubr.f32.gmra.mrb[0].mxu0 %v270
        %v360 = vpop.f32.mrb[0].mxu0
        %v361 = vadd.f32 0.0, %v360
        %v362 = vpop.f32.mrb[0].mxu0
        %363 = vmatprep.mubr.f32.mxu0 0.0
        %364 = vmatmul.mubr.f32.gmra.mrb[0].mxu0 %v271
        %v365 = vpop.f32.mrb[0].mxu0
        %v366 = vadd.f32 0.0, %v365
        %v367 = vpop.f32.mrb[0].mxu0
        %368 = vmatprep.mubr.f32.mxu0 0.0
        %369 = vmatmul.mubr.f32.gmra.mrb[0].mxu0 %v272
        %v370 = vpop.f32.mrb[0].mxu0
        %v371 = vadd.f32 0.0, %v370
        %v372 = vpop.f32.mrb[0].mxu0
        %373 = vdwg.mxu0
        %v374 = vadd.f32 %v265, %v356
        %v375 = vadd.f32 %v266, %v361
        %v376 = vadd.f32 %v267, %v366
        %v377 = vadd.f32 %v268, %v371
        %378 = vst [vmem:[#allocation2] sm:$0xff] %v374
        %379 = vst [vmem:[#allocation2 + $0x8] sm:$0xff] %v375
        %380 = vst [vmem:[#allocation2 + $0x10] sm:$0xff] %v376
        %381 = vst [vmem:[#allocation2 + $0x18] sm:$0xff] %v377
        // Predicated region
        $region45: #{tpu_custom_call.1} parent=31 // pred_check
          %p382 = pneg %p257
        $region46: #{tpu_custom_call.1} parent=31 // pred_check_branch
          %384 = sbr.rel (%p382) target = $region48
        $region47: #{tpu_custom_call.1} parent=31 // pred_region
          %v385 = vld [vmem:[#allocation2] sm:$0xff]
          %v386 = vld [vmem:[#allocation2 + $0x8] sm:$0xff]
          %v387 = vld [vmem:[#allocation2 + $0x10] sm:$0xff]
          %v388 = vld [vmem:[#allocation2 + $0x18] sm:$0xff]
          %v389 = vld [vmem:[%s255] sm:$0x1]
          %v391 = vlaneseq
          %v392 = vshrl.u32 %v391, 7
          %v393 = vsub.s32 0, %v392
          %v394 = vrot.slane %v389, %v393
          %v396 = vadd.f32 %v385, %v394
          %v397 = vadd.f32 %v386, %v394
          %v398 = vadd.f32 %v387, %v394
          %v399 = vadd.f32 %v388, %v394
          %400 = vst [vmem:[%s250] sm:$0xff] %v396
          %401 = vst [vmem:[%s250 + $0x8] sm:$0xff] %v397
          %402 = vst [vmem:[%s250 + $0x10] sm:$0xff] %v398
          %403 = vst [vmem:[%s250 + $0x18] sm:$0xff] %v399
        $region48: #{tpu_custom_call.1} parent=31 // pred_fallthru
          _
        %s404 = sand.u32 %s132, 1
        %s405 = scalar_lea.sflag [#allocation5], %s404
        %s406 = sand.u32 %s132, 1
        %s407 = smul.addr %s406, 32
        %s408 = scalar_lea.vmem [#allocation8], %s407
        // Predicated region
        $region49: #{tpu_custom_call.1} parent=31 // pred_check
          %p409 = pneg %p142
        $region50: #{tpu_custom_call.1} parent=31 // pred_check_branch
          %411 = sbr.rel (%p409) target = $region52
        $region51: #{tpu_custom_call.1} parent=31 // pred_region
          %s412 = smul.u32 4, %s26
          %s414 = ssub.s32 512, 512
          %415 = vsyncadd %s405, %s414
          %s416 = smul.addr %s412, 3
          %s417 = sadd.s32 %s27, %s416
          %s418 = smul.addr %s417, 128
          %s419 = scalar_lea.hbm %s3, %s418
          %s420 = sshll.u32 %s408, 4
          %s421 = int_to_ptr.vmem [resolvable:$true] %s420
          %426 = dma.vmem_to_hbm [thread:$0]  %s421, 512, %s419, %s405, 128, 384, 8
        $region52: #{tpu_custom_call.1} parent=31 // pred_fallthru
          _
      $region32: #{tpu_custom_call.1} parent=5 // pred_fallthru
        _
      %p427 = scmp.le.s32.totalorder 2, %s16
      // Predicated region
      $region53: #{tpu_custom_call.1} parent=5 // pred_check
        %p428 = pneg %p427
      $region54: #{tpu_custom_call.1} parent=5 // pred_check_branch
        %430 = sbr.rel (%p428) target = $region56
      $region55: #{tpu_custom_call.1} parent=5 // pred_region
        %s431 = ssub.s32 %s16, 2
        // Predicated region
        $region57: #{tpu_custom_call.1} parent=55 // pred_check
          %p432 = pneg %p148
        $region58: #{tpu_custom_call.1} parent=55 // pred_check_branch
          %434 = sbr.rel (%p432) target = $region60
        $region59: #{tpu_custom_call.1} parent=55 // pred_region
          %s435 = sand.u32 %s133, 1
          %s436 = scalar_lea.sflag [#allocation5], %s435
          %s437 = sand.u32 %s133, 1
          %s438 = smul.addr %s437, 32
          %s439 = scalar_lea.vmem [#allocation8], %s438
          %440 = dma.done %s436, 512
        $region60: #{tpu_custom_call.1} parent=55 // pred_fallthru
          _
      $region56: #{tpu_custom_call.1} parent=5 // pred_fallthru
        _
    $region6: #{tpu_custom_call.1} parent=1 // loop_footer
      %s20 = sadd.s32 1, %s16
    $region7: #{tpu_custom_call.1} parent=1 // loop_footer_branch
      %15 = sbr.rel target = $region3
    $region8: #{tpu_custom_call.1} parent=1 // loop_exit
      _
    %441 = vsyncpa [#allocation4], 1
    %s442 = scalar_lea.sflag [#allocation4], 1
    %443 = vsyncpa %s442, 1
    %444 = vsyncpa [#allocation7], 1
    %s445 = scalar_lea.sflag [#allocation7], 1
    %446 = vsyncpa %s445, 1
    %447 = vsyncpa [#allocation5], 1
    %s448 = scalar_lea.sflag [#allocation5], 1
    %449 = vsyncpa %s448, 1

</llo_original>
